<compile_context>
chip_gen: v6e
topology: v6e:2x2x1
jax: 0.10.0
libtpu: 0.0.40
codegen_flags: <defaults>
</compile_context>

<pallas_src>
import functools

import jax
import jax.numpy as jnp
from jax import lax
from jax.experimental import pallas as pl
from jax.experimental.pallas import tpu as pltpu

ALPHA = 0.25
GAMMA = 2.0
USE_SIGMOID = True

_LANE = 128
_SUBLANE = 8
_CHUNK_ROWS = 64        # fused-reduce chunk: 64x128 f32 = 8 vregs per operand
_MAX_TILE_ROWS = 8192   # 8192*128*4 B = 4 MiB per f32 input block
_SIMPLE_MAX_ROWS = 256  # at/below this, a single tiny one-block kernel


def _round_up(x, m):
    return ((x + m - 1) // m) * m


def _pow_gamma(x, gamma):
    # gamma is a static Python float; special-case the module default (2.0).
    if gamma == 2.0:
        return x * x
    if gamma == 1.0:
        return x
    return jnp.power(x, gamma)


def _elementwise(x, t, alpha, gamma, use_sigmoid):
    """Per-element focal-loss term and positive indicator (all f32)."""
    is_pos = t > 0.0
    if use_sigmoid:
        # Reference feeds p = sigmoid(pred) into BCE-with-logits.  Since
        # p in (0,1): max(p, 0) == p and |p| == p (valid only on this path).
        p = jax.nn.sigmoid(x)
        bce = p * (1.0 - t) + jnp.log1p(jnp.exp(-p))
        q = jnp.where(is_pos, jnp.abs(t - p), p)
    else:
        p = x
        bce = jnp.maximum(p, 0.0) - p * t + jnp.log1p(jnp.exp(-jnp.abs(p)))
        q = jnp.where(is_pos, jnp.abs(t - p), jnp.abs(p))
    # (t > 0) and (t <= 0) are complementary -> one select + one power is
    # equivalent to the reference's indicator-weighted sum of two powers.
    fw = jnp.where(is_pos, alpha, 1.0 - alpha) * _pow_gamma(q, gamma)
    valid = t != -1.0                       # mask = ~(label == -1)
    loss = jnp.where(valid, bce * fw, 0.0)  # select: no NaN propagation
    pos = jnp.where(is_pos, 1.0, 0.0)
    return loss, pos


def _reduce_to_sublane(v):
    # (C,128) -> (C/8, 8, 128) matches the native vreg tiling, so the sum over
    # axis 0 is plain VPU vector adds (no XLU work, no VMEM round trip).
    return v.reshape(-1, _SUBLANE, _LANE).sum(axis=0)


def _focal_kernel_fused(pred_ref, label_ref, loss_out_ref, pos_out_ref, *,
                        alpha, gamma, use_sigmoid, tile_rows, grid_size,
                        total_rows):
    n_chunks = tile_rows // _CHUNK_ROWS
    zeros = jnp.zeros((_SUBLANE, _LANE), jnp.float32)

    def chunk_loss_pos(row0, row_limit=None):
        x = pred_ref[pl.ds(row0, _CHUNK_ROWS), :].astype(jnp.float32)
        t = label_ref[pl.ds(row0, _CHUNK_ROWS), :].astype(jnp.float32)
        loss, pos = _elementwise(x, t, alpha, gamma, use_sigmoid)
        if row_limit is not None:
            # Only the very last chunk of the very last grid step pays this.
            row = lax.broadcasted_iota(jnp.int32, (_CHUNK_ROWS, _LANE), 0)
            inb = row < row_limit
            loss = jnp.where(inb, loss, 0.0)
            pos = jnp.where(inb, pos, 0.0)
        return _reduce_to_sublane(loss), _reduce_to_sublane(pos)

    def run(n_full, tail_rows):
        if n_full > 0:
            def body(j, carry):
                la, pa = carry
                r0 = pl.multiple_of(j * _CHUNK_ROWS, _CHUNK_ROWS)
                dl, dp = chunk_loss_pos(r0)
                return la + dl, pa + dp
            la, pa = lax.fori_loop(0, n_full, body, (zeros, zeros), unroll=2)
        else:
            la, pa = zeros, zeros
        if tail_rows:
            dl, dp = chunk_loss_pos(n_full * _CHUNK_ROWS, row_limit=tail_rows)
            la = la + dl
            pa = pa + dp
        loss_out_ref[...] = la
        pos_out_ref[...] = pa

    last = grid_size - 1
    last_valid = total_rows - last * tile_rows   # static Python int
    if last_valid == tile_rows:
        # No ragged tail anywhere: every step runs fully unmasked.
        run(n_chunks, 0)
    else:
        i = pl.program_id(0)

        @pl.when(i < last)
        def _():
            run(n_chunks, 0)

        @pl.when(i == last)
        def _():
            run(last_valid // _CHUNK_ROWS, last_valid % _CHUNK_ROWS)


def _focal_kernel_simple(pred_ref, label_ref, loss_out_ref, pos_out_ref, *,
                         alpha, gamma, use_sigmoid):
    x = pred_ref[...].astype(jnp.float32)
    t = label_ref[...].astype(jnp.float32)
    loss, pos = _elementwise(x, t, alpha, gamma, use_sigmoid)
    loss_out_ref[...] = jnp.sum(loss, axis=0, keepdims=True)
    pos_out_ref[...] = jnp.sum(pos, axis=0, keepdims=True)


def _num_tensorcores():
    # v4 (megacore) and v7x expose 2 TensorCores per device; v5e/v6e expose 1.
    try:
        kind = jax.devices()[0].device_kind.lower()
    except Exception:
        return 1
    return 2 if ("v7" in kind or "v4" in kind) else 1


def focal_loss(pred, target, alpha=ALPHA, gamma=GAMMA, use_sigmoid=USE_SIGMOID):
    """pred: (B, HW); target: (B, HW) with values in {-1, 0, 1}.

    pred/target may be any float/int dtype; they are streamed natively and
    cast to f32 inside the kernel.
    """
    pred_f = pred.reshape(-1)
    label_f = target.reshape(-1)
    n = pred_f.shape[0]
    if n == 0:
        return jnp.float32(0.0)

    # Lane padding only when B*HW % 128 != 0; padded labels get -1 so they are
    # ignored exactly like `label == -1`.  (One extra HBM pass, ragged-n only.)
    n128 = _round_up(n, _LANE)
    if n128 != n:
        if not (jnp.issubdtype(label_f.dtype, jnp.floating)
                or jnp.issubdtype(label_f.dtype, jnp.signedinteger)):
            label_f = label_f.astype(jnp.float32)
        pred_f = jnp.pad(pred_f, (0, n128 - n))
        label_f = jnp.pad(label_f, (0, n128 - n), constant_values=-1)
    rows = n128 // _LANE

    # Layout-preserving views; no extra HBM copies in the common case.
    pred_2d = pred_f.reshape(rows, _LANE)
    label_2d = label_f.reshape(rows, _LANE)

    alpha = float(alpha)
    gamma = float(gamma)
    use_sigmoid = bool(use_sigmoid)

    if rows <= _SIMPLE_MAX_ROWS:
        # Tiny input: one block, one step.
        tile_rows, grid_size, out_rows = rows, 1, 1
        kernel = functools.partial(_focal_kernel_simple, alpha=alpha,
                                   gamma=gamma, use_sigmoid=use_sigmoid)
    else:
        n_tc = _num_tensorcores()
        # Single-TC chips: one big block (best HBM-roofline fraction).
        # Multi-TC chips: aim for >= 4 grid steps so both cores get work.
        target_rows = pl.cdiv(rows, 2 * n_tc) if n_tc > 1 else rows
        tile_rows = min(_MAX_TILE_ROWS, _round_up(target_rows, _CHUNK_ROWS))
        grid_size = pl.cdiv(rows, tile_rows)
        out_rows = _SUBLANE
        kernel = functools.partial(_focal_kernel_fused, alpha=alpha,
                                   gamma=gamma, use_sigmoid=use_sigmoid,
                                   tile_rows=tile_rows, grid_size=grid_size,
                                   total_rows=rows)

    n_elems = rows * _LANE
    in_bytes = n_elems * (pred_2d.dtype.itemsize + label_2d.dtype.itemsize)
    out_bytes = 2 * 4 * grid_size * out_rows * _LANE
    cost = pl.CostEstimate(flops=20 * n_elems, transcendentals=3 * n_elems,
                           bytes_accessed=in_bytes + out_bytes)

    loss_parts, pos_parts = pl.pallas_call(
        kernel,
        out_shape=(
            jax.ShapeDtypeStruct((grid_size * out_rows, _LANE), jnp.float32),
            jax.ShapeDtypeStruct((grid_size * out_rows, _LANE), jnp.float32),
        ),
        grid_spec=pltpu.PrefetchScalarGridSpec(
            num_scalar_prefetch=0,
            grid=(grid_size,),
            in_specs=[
                pl.BlockSpec((tile_rows, _LANE), lambda i: (i, 0)),
                pl.BlockSpec((tile_rows, _LANE), lambda i: (i, 0)),
            ],
            out_specs=[
                pl.BlockSpec((out_rows, _LANE), lambda i: (i, 0)),
                pl.BlockSpec((out_rows, _LANE), lambda i: (i, 0)),
            ],
        ),
        compiler_params=pltpu.CompilerParams(
            dimension_semantics=("parallel",),
            vmem_limit_bytes=32 * 1024 * 1024),
        cost_estimate=cost,
    )(pred_2d, label_2d)

    loss_sum = jnp.sum(loss_parts, dtype=jnp.float32)
    pos_num = jnp.maximum(jnp.sum(pos_parts, dtype=jnp.float32), 1.0)
    return loss_sum / pos_num


def _focal_loss_ref(pred, target, alpha=ALPHA, gamma=GAMMA,
                    use_sigmoid=USE_SIGMOID):
    # Pure-JAX reference mirroring the PyTorch semantics (mask as multiply).
    x = pred.reshape(-1).astype(jnp.float32)
    t = target.reshape(-1).astype(jnp.float32)
    p = jax.nn.sigmoid(x) if use_sigmoid else x
    pos_num = jnp.maximum(jnp.sum(t > 0).astype(jnp.float32), 1.0)
    valid = (t != -1.0).astype(jnp.float32)
    fw = (alpha * _pow_gamma(jnp.abs(t - p), gamma) * (t > 0.0)
          + (1.0 - alpha) * _pow_gamma(jnp.abs(p), gamma) * (t <= 0.0))
    bce = jnp.maximum(p, 0.0) - p * t + jnp.log1p(jnp.exp(-jnp.abs(p)))
    return jnp.sum(bce * fw * valid) / pos_num


if __name__ == "__main__":
    key = jax.random.PRNGKey(0)
    k1, k2, k3, k4, k5, k6 = jax.random.split(key, 6)

    # ---- small case matching the module's (B, HW) contract (simple path) ----
    B, H, W = 2, 16, 16
    HW = H * W
    pred = jax.random.normal(k1, (B, HW), dtype=jnp.float32)
    target = jax.random.randint(k2, (B, HW), -1, 2).astype(jnp.float32)  # {-1,0,1}

    loss = jax.block_until_ready(focal_loss(pred, target))
    ref = jax.block_until_ready(_focal_loss_ref(pred, target))
    assert jnp.isfinite(loss), "non-finite loss"
    assert jnp.allclose(loss, ref, rtol=1e-5, atol=1e-6), (loss, ref)

    # ---- larger case: fused path, native narrow dtypes, ragged row tail ----
    B2, HW2 = 2, 600000   # n = 1.2M -> rows = 9375, multi-chunk + masked tail
    pred2 = jax.random.normal(k3, (B2, HW2), dtype=jnp.float32).astype(jnp.bfloat16)
    target2 = jax.random.randint(k4, (B2, HW2), -1, 2).astype(jnp.int8)

    loss2 = jax.block_until_ready(focal_loss(pred2, target2))
    ref2 = jax.block_until_ready(_focal_loss_ref(pred2, target2))
    assert jnp.isfinite(loss2), "non-finite loss (large case)"
    assert jnp.allclose(loss2, ref2, rtol=1e-3, atol=1e-4), (loss2, ref2)

    # ---- lane-ragged case (n % 128 != 0) exercising the padded path ----
    B3, HW3 = 4, 70001
    pred3 = jax.random.normal(k5, (B3, HW3), dtype=jnp.float32)
    target3 = jax.random.randint(k6, (B3, HW3), -1, 2).astype(jnp.float32)

    loss3 = jax.block_until_ready(focal_loss(pred3, target3))
    ref3 = jax.block_until_ready(_focal_loss_ref(pred3, target3))
    assert jnp.isfinite(loss3), "non-finite loss (ragged case)"
    assert jnp.allclose(loss3, ref3, rtol=1e-4, atol=1e-5), (loss3, ref3)

    print("KERNEL_OK")
</pallas_src>

<mosaic_0001>
module attributes {stable_mosaic.version = 11 : i64} {
  func.func @_focal_kernel_simple(%arg0: i32, %arg1: memref<4x128xf32, #tpu.memory_space<vmem>>, %arg2: memref<4x128xf32, #tpu.memory_space<vmem>>, %arg3: memref<1x128xf32, #tpu.memory_space<vmem>>, %arg4: memref<1x128xf32, #tpu.memory_space<vmem>>) attributes {dimension_semantics = [#tpu.dimension_semantics<parallel>], iteration_bounds = array<i64: 1>, scalar_prefetch = 0 : i64, scratch_operands = 0 : i64, tpu.core_type = #tpu.core_type<tc>, window_params = [{transform_indices = @transform_0, window_bounds = array<i64: 4, 128>}, {transform_indices = @transform_1, window_bounds = array<i64: 4, 128>}, {transform_indices = @transform_2, window_bounds = array<i64: 1, 128>}, {transform_indices = @transform_3, window_bounds = array<i64: 1, 128>}]} {
    %c0 = arith.constant 0 : index
    %c0_0 = arith.constant 0 : index
    %0 = vector.load %arg1[%c0, %c0_0] : memref<4x128xf32, #tpu.memory_space<vmem>>, vector<4x128xf32>
    %c0_1 = arith.constant 0 : index
    %c0_2 = arith.constant 0 : index
    %1 = vector.load %arg2[%c0_1, %c0_2] : memref<4x128xf32, #tpu.memory_space<vmem>>, vector<4x128xf32>
    %cst = arith.constant 0.000000e+00 : f32
    %2 = vector.broadcast %cst : f32 to vector<4x128xf32>
    %3 = arith.cmpf ogt, %1, %2 : vector<4x128xf32>
    %4 = arith.negf %0 : vector<4x128xf32>
    %5 = math.exp %4 : vector<4x128xf32>
    %cst_3 = arith.constant 1.000000e+00 : f32
    %6 = vector.broadcast %cst_3 : f32 to vector<4x128xf32>
    %7 = arith.addf %6, %5 : vector<4x128xf32>
    %8 = arith.divf %6, %7 : vector<4x128xf32>
    %cst_4 = arith.constant 1.000000e+00 : f32
    %9 = vector.broadcast %cst_4 : f32 to vector<4x128xf32>
    %10 = arith.subf %9, %1 : vector<4x128xf32>
    %11 = arith.mulf %8, %10 : vector<4x128xf32>
    %cst_5 = arith.constant 0.000000e+00 : f32
    %12 = vector.broadcast %cst_5 : f32 to vector<4x128xf32>
    %13 = arith.subf %12, %8 : vector<4x128xf32>
    %14 = math.exp %13 : vector<4x128xf32>
    %15 = math.log1p %14 : vector<4x128xf32>
    %16 = arith.addf %11, %15 : vector<4x128xf32>
    %17 = arith.subf %1, %8 : vector<4x128xf32>
    %18 = math.absf %17 : vector<4x128xf32>
    %19 = arith.select %3, %18, %8 : vector<4x128xi1>, vector<4x128xf32>
    %cst_6 = arith.constant 2.500000e-01 : f32
    %cst_7 = arith.constant 7.500000e-01 : f32
    %20 = vector.broadcast %cst_6 : f32 to vector<4x128xf32>
    %21 = vector.broadcast %cst_7 : f32 to vector<4x128xf32>
    %22 = arith.select %3, %20, %21 : vector<4x128xi1>, vector<4x128xf32>
    %23 = arith.mulf %19, %19 : vector<4x128xf32>
    %24 = arith.mulf %22, %23 : vector<4x128xf32>
    %cst_8 = arith.constant -1.000000e+00 : f32
    %25 = vector.broadcast %cst_8 : f32 to vector<4x128xf32>
    %26 = arith.cmpf one, %1, %25 : vector<4x128xf32>
    %27 = arith.mulf %16, %24 : vector<4x128xf32>
    %cst_9 = arith.constant 0.000000e+00 : f32
    %28 = vector.broadcast %cst_9 : f32 to vector<4x128xf32>
    %29 = arith.select %26, %27, %28 : vector<4x128xi1>, vector<4x128xf32>
    %cst_10 = arith.constant 1.000000e+00 : f32
    %cst_11 = arith.constant 0.000000e+00 : f32
    %30 = vector.broadcast %cst_10 : f32 to vector<4x128xf32>
    %31 = vector.broadcast %cst_11 : f32 to vector<4x128xf32>
    %32 = arith.select %3, %30, %31 : vector<4x128xi1>, vector<4x128xf32>
    %cst_12 = arith.constant dense<0.000000e+00> : vector<128xf32>
    %33 = vector.multi_reduction <add>, %29, %cst_12 [0] : vector<4x128xf32> to vector<128xf32>
    %34 = vector.shape_cast %33 : vector<128xf32> to vector<1x128xf32>
    %c0_13 = arith.constant 0 : index
    %c0_14 = arith.constant 0 : index
    %35 = vector.load %arg3[%c0_13, %c0_14] : memref<1x128xf32, #tpu.memory_space<vmem>>, vector<1x128xf32>
    tpu.vector_store %arg3[%c0_13, %c0_14], %34 {strides = array<i32>} : memref<1x128xf32, #tpu.memory_space<vmem>>, vector<1x128xf32>,
    %cst_15 = arith.constant dense<0.000000e+00> : vector<128xf32>
    %36 = vector.multi_reduction <add>, %32, %cst_15 [0] : vector<4x128xf32> to vector<128xf32>
    %37 = vector.shape_cast %36 : vector<128xf32> to vector<1x128xf32>
    %c0_16 = arith.constant 0 : index
    %c0_17 = arith.constant 0 : index
    %38 = vector.load %arg4[%c0_16, %c0_17] : memref<1x128xf32, #tpu.memory_space<vmem>>, vector<1x128xf32>
    tpu.vector_store %arg4[%c0_16, %c0_17], %37 {strides = array<i32>} : memref<1x128xf32, #tpu.memory_space<vmem>>, vector<1x128xf32>,
    return
  }
  func.func @transform_0(%arg0: i32) -> (i32, i32) {
    %c0_i32 = arith.constant 0 : i32
    %c0_i32_0 = arith.constant 0 : i32
    return %arg0, %c0_i32 : i32, i32
  }
  func.func @transform_1(%arg0: i32) -> (i32, i32) {
    %c0_i32 = arith.constant 0 : i32
    %c0_i32_0 = arith.constant 0 : i32
    return %arg0, %c0_i32 : i32, i32
  }
  func.func @transform_2(%arg0: i32) -> (i32, i32) {
    %c0_i32 = arith.constant 0 : i32
    %c0_i32_0 = arith.constant 0 : i32
    return %arg0, %c0_i32 : i32, i32
  }
  func.func @transform_3(%arg0: i32) -> (i32, i32) {
    %c0_i32 = arith.constant 0 : i32
    %c0_i32_0 = arith.constant 0 : i32
    return %arg0, %c0_i32 : i32, i32
  }
}

</mosaic_0001>

<llo_original>
// kernel: tpu_custom_call.1
$region0: #{tpu_custom_call.1}
  #allocation0 [shape = 'u32[]', space=smem, size = 0x4, offset = 0x4, fixed_abs, tag = 'smem constant byte address 0x4 - core index']
  #allocation1 [shape = 'u32[144,128]{1,0:T(1,128)}', space=vmem, size = 0x12000, scoped, tag = 'internal scratch']
  %s0 = inlined_call_operand.hbm [shape: f32[4,128], index: 0, kind: input, shape index: {}]
  %s1 = inlined_call_operand.hbm [shape: f32[4,128], index: 1, kind: input, shape index: {}]
  %s2 = inlined_call_operand.hbm [shape: f32[1,128], index: 2, kind: output, shape index: {0}]
  %s3 = inlined_call_operand.hbm [shape: f32[1,128], index: 3, kind: output, shape index: {1}]
  %4 = xla_tuple %s2, %s3
  %s5 = sld [smem:[#allocation0]]
  $region34: #{tpu_custom_call.1} parent=0
    _
  %s7 = ssub.s32 1, %s5
  %s8 = scalar_select 0, %s7, %s5
  $region1: #{tpu_custom_call.1} parent=0
    #allocation2 [shape = 'u8[2048]{0}', space=vmem, size = 0x800, scoped, tag = 'input window, operand 0, single buffered']
    #allocation3 [shape = 's32[1]{0}', space=sflag, size = 0x4, scoped, tag = 'scoped memory for tpu_custom_call.1']
    #allocation4 [shape = 's32[1]{0}', space=sflag, size = 0x4, scoped, tag = 'scoped memory for tpu_custom_call.1']
    #allocation5 [shape = 'u8[2048]{0}', space=vmem, size = 0x800, scoped, tag = 'input window, operand 1, single buffered']
    #allocation6 [shape = 's32[1]{0}', space=sflag, size = 0x4, scoped, tag = 'scoped memory for tpu_custom_call.1']
    #allocation7 [shape = 'u8[512]{0}', space=vmem, size = 0x400, scoped, tag = 'output window, operand 0, single buffered']
    #allocation8 [shape = 'u8[512]{0}', space=vmem, size = 0x400, scoped, tag = 'output window, operand 1, single buffered']
    #allocation9 [shape = 's32[1]{0}', space=sflag, size = 0x4, scoped, tag = 'scoped memory for tpu_custom_call.1']
    %9 = vsyncpa [#allocation3], 0
    %10 = vsyncpa [#allocation6], 0
    %11 = vsyncpa [#allocation4], 0
    %12 = vsyncpa [#allocation9], 0
    // Predicated region
    $region2: #{tpu_custom_call.1} parent=1 // pred_check
      _
    $region3: #{tpu_custom_call.1} parent=1 // pred_check_branch
      %14 = sbr.rel (0) target = $region5
    $region4: #{tpu_custom_call.1} parent=1 // pred_region
      %s16 = ssub.s32 64, 64
      %17 = vsyncadd [#allocation3], %s16
      %s19 = sshll.u32 [#allocation2], 4
      %s20 = int_to_ptr.vmem [resolvable:$true] %s19
      %22 = dma.hbm_to_vmem [thread:$0]  %s0, 64, %s20, [#allocation3]
    $region5: #{tpu_custom_call.1} parent=1 // pred_fallthru
      _
    // Predicated region
    $region6: #{tpu_custom_call.1} parent=1 // pred_check
      _
    $region7: #{tpu_custom_call.1} parent=1 // pred_check_branch
      %24 = sbr.rel (0) target = $region9
    $region8: #{tpu_custom_call.1} parent=1 // pred_region
      %s26 = ssub.s32 64, 64
      %27 = vsyncadd [#allocation6], %s26
      %s29 = sshll.u32 [#allocation5], 4
      %s30 = int_to_ptr.vmem [resolvable:$true] %s29
      %32 = dma.hbm_to_vmem [thread:$0]  %s1, 64, %s30, [#allocation6]
    $region9: #{tpu_custom_call.1} parent=1 // pred_fallthru
      _
    // Predicated region
    $region10: #{tpu_custom_call.1} parent=1 // pred_check
      _
    $region11: #{tpu_custom_call.1} parent=1 // pred_check_branch
      %34 = sbr.rel (0) target = $region13
    $region12: #{tpu_custom_call.1} parent=1 // pred_region
      %35 = dma.done [#allocation3], 64
    $region13: #{tpu_custom_call.1} parent=1 // pred_fallthru
      _
    // Predicated region
    $region14: #{tpu_custom_call.1} parent=1 // pred_check
      _
    $region15: #{tpu_custom_call.1} parent=1 // pred_check_branch
      %37 = sbr.rel (0) target = $region17
    $region16: #{tpu_custom_call.1} parent=1 // pred_region
      %38 = dma.done [#allocation6], 64
    $region17: #{tpu_custom_call.1} parent=1 // pred_fallthru
      _
    %v39 = vld [vmem:[#allocation2] sm:$0xf]
    %v40 = vld [vmem:[#allocation5] sm:$0xf]
    %vm41 = vcmp.gt.f32.partialorder %v40, 0.0
    %v42 = vxor.u32 %v39, 2147483648
    %v43 = vmul.f32 %v42, 1.442695
    %v44 = vpow.pop %v43
    %v45 = vadd.f32 %v44, 1.0
    %v46 = vrcp.pop %v45
    %v47 = vmul.f32 1.0, %v46
    %v48 = vsub.f32 1.0, %v40
    %v49 = vmul.f32 %v47, %v48
    %v50 = vsub.f32 0.0, %v47
    %v51 = vmul.f32 %v50, 1.442695
    %v52 = vpow.pop %v51
    %v53 = vadd.f32 %v52, 1.0
    %v54 = vlog2.pop %v53
    %v55 = vmul.f32 %v54, 0.6931472
    %v56 = vmul.f32 -0.5, %v52
    %v57 = vadd.f32 %v56, 1.0
    %v58 = vmul.f32 %v57, %v52
    %v59 = vand.u32 2147483647, %v52
    %vm60 = vcmp.lt.f32.partialorder %v59, 0.0004427343
    %v61 = vsel %vm60, %v58, %v55
    %v62 = vadd.f32 %v49, %v61
    %v63 = vsub.f32 %v40, %v47
    %v64 = vand.u32 2147483647, %v63
    %v65 = vsel %vm41, %v64, %v47
    %v66 = vsel %vm41, 0.25, 0.75
    %v67 = vmul.f32 %v65, %v65
    %v68 = vmul.f32 %v66, %v67
    %vm69 = vcmp.ne.f32.partialorder %v40, -1.0
    %v70 = vmul.f32 %v62, %v68
    %v71 = vsel %vm69, %v70, 0.0
    %v72 = vsel %vm41, 1.0, 0.0
    %vm73 = vcmask 1043456
    %v74 = vsel %vm73, %v71, 0.0
    %v75 = vrot.slane %v74, 4
    %v76 = vadd.f32 %v74, %v75
    %v77 = vrot.slane %v76, 2
    %v78 = vadd.f32 %v76, %v77
    %v79 = vrot.slane %v78, 1
    %v80 = vadd.f32 %v78, %v79
    %81 = vst [vmem:[#allocation7] sm:$0x1] %v80
    %v82 = vsel %vm73, %v72, 0.0
    %v83 = vrot.slane %v82, 4
    %v84 = vadd.f32 %v82, %v83
    %v85 = vrot.slane %v84, 2
    %v86 = vadd.f32 %v84, %v85
    %v87 = vrot.slane %v86, 1
    %v88 = vadd.f32 %v86, %v87
    %89 = vst [vmem:[#allocation8] sm:$0x1] %v88
    // Predicated region
    $region18: #{tpu_custom_call.1} parent=1 // pred_check
      _
    $region19: #{tpu_custom_call.1} parent=1 // pred_check_branch
      %91 = sbr.rel (0) target = $region21
    $region20: #{tpu_custom_call.1} parent=1 // pred_region
      %s93 = ssub.s32 16, 16
      %94 = vsyncadd [#allocation4], %s93
      %s96 = sshll.u32 [#allocation7], 4
      %s97 = int_to_ptr.vmem [resolvable:$true] %s96
      %99 = dma.vmem_to_hbm [thread:$0]  %s97, 16, %s2, [#allocation4]
    $region21: #{tpu_custom_call.1} parent=1 // pred_fallthru
      _
    // Predicated region
    $region22: #{tpu_custom_call.1} parent=1 // pred_check
      _
    $region23: #{tpu_custom_call.1} parent=1 // pred_check_branch
      %101 = sbr.rel (0) target = $region25
    $region24: #{tpu_custom_call.1} parent=1 // pred_region
      %s103 = ssub.s32 16, 16
      %104 = vsyncadd [#allocation9], %s103
      %s106 = sshll.u32 [#allocation8], 4
      %s107 = int_to_ptr.vmem [resolvable:$true] %s106
      %109 = dma.vmem_to_hbm [thread:$0]  %s107, 16, %s3, [#allocation9]
    $region25: #{tpu_custom_call.1} parent=1 // pred_fallthru
      _
    // Predicated region
    $region26: #{tpu_custom_call.1} parent=1 // pred_check
      _
    $region27: #{tpu_custom_call.1} parent=1 // pred_check_branch
      %111 = sbr.rel (0) target = $region29
    $region28: #{tpu_custom_call.1} parent=1 // pred_region
      %112 = dma.done [#allocation4], 16
    $region29: #{tpu_custom_call.1} parent=1 // pred_fallthru
      _
    // Predicated region
    $region30: #{tpu_custom_call.1} parent=1 // pred_check
      _
    $region31: #{tpu_custom_call.1} parent=1 // pred_check_branch
      %114 = sbr.rel (0) target = $region33
    $region32: #{tpu_custom_call.1} parent=1 // pred_region
      %115 = dma.done [#allocation9], 16
    $region33: #{tpu_custom_call.1} parent=1 // pred_fallthru
      _
    %116 = vsyncpa [#allocation3], 1
    %117 = vsyncpa [#allocation6], 1
    %118 = vsyncpa [#allocation4], 1
    %119 = vsyncpa [#allocation9], 1

</llo_original>
